<compile_context>
chip_gen: v6e
topology: v6e:2x2x1
jax: 0.10.0
libtpu: 0.0.40
codegen_flags: <defaults>
</compile_context>

<pallas_src>
import functools
import math

import jax
import jax.numpy as jnp
from jax.experimental import pallas as pl
from jax.experimental.pallas import tpu as pltpu

_VMEM_LIMIT = 64 * 1024 * 1024        # <= v7x physical VMEM; ample on v5e / v6e
_VMEM_DATA_BUDGET = 24 * 1024 * 1024  # target bytes of pipelined per-tile data
_LANE = 128                           # lane width (head padding granularity)
_SEQ_ALIGN = 16                       # bf16 sublane packing => 16-align seq dim


def _round_up(x, m):
    return ((x + m - 1) // m) * m


def _pick_batch_tile(B, bytes_per_row, cap=512):
    """Largest batch tile (multiple of 8, or full B if B<=8) within budget."""
    if B <= 8:
        return B
    t = min(B, cap, max(8, _VMEM_DATA_BUDGET // max(1, bytes_per_row)))
    return max(8, (t // 8) * 8)


# ---------------------------------------------------------------------------
# Kernel 1: x_t-independent precompute (once per forward).
# K/V over the padded sequence: row 0 = x_r, rows 1..N = proj(Y), rest = pad.
# ---------------------------------------------------------------------------
def _encode_kernel(y_ref, wp_ref, bp_ref, xr_ref, wk_ref, bk_ref, wv_ref, bv_ref,
                   k_ref, v_ref):
    f32 = jnp.float32
    bf16 = jnp.bfloat16
    TB, S, C = y_ref.shape
    D = wp_ref.shape[1]

    # Project the whole padded sequence in one MXU pass (row 0 and pad rows are
    # zero inputs; row 0 is replaced by x_r below, pad rows are masked out of
    # the softmax in the step kernel).
    y2 = y_ref[...].reshape(TB * S, C)                                    # bf16
    xp = jnp.dot(y2, wp_ref[...], preferred_element_type=f32) + bp_ref[...]
    xp3 = xp.reshape(TB, S, D)                                            # f32

    row = jax.lax.broadcasted_iota(jnp.int32, (TB, S, D), 1)
    xr_b = jnp.broadcast_to(xr_ref[...][None, :, :], (TB, S, D))
    seq = jnp.where(row == 0, xr_b, xp3).reshape(TB * S, D).astype(bf16)

    k = jnp.dot(seq, wk_ref[...], preferred_element_type=f32) + bk_ref[...]
    v = jnp.dot(seq, wv_ref[...], preferred_element_type=f32) + bv_ref[...]
    k_ref[...] = k.reshape(TB, S, D).astype(k_ref.dtype)   # full-block store
    v_ref[...] = v.reshape(TB, S, D).astype(v_ref.dtype)   # full-block store


def ica_encode(Y, p, seq_pad):
    """Compute K, V (bf16) over the padded [x_r ; proj(Y) ; pad] sequence."""
    B, N, C = Y.shape
    D = p["wp_t"].shape[1]
    S = seq_pad

    # Row 0 placeholder (replaced by x_r in-kernel), rows 1..N = Y, tail = pad.
    y_pad = jnp.pad(Y, ((0, 0), (1, S - 1 - N), (0, 0))).astype(jnp.bfloat16)

    tile_b = _pick_batch_tile(
        B, bytes_per_row=2 * S * C * 2 + 4 * S * D * 2 + 6 * S * D * 4)
    grid = (pl.cdiv(B, tile_b),)

    c2 = lambda i: (0, 0)
    in_specs = [
        pl.BlockSpec((tile_b, S, C), lambda i: (i, 0, 0)),   # Y (padded, bf16)
        pl.BlockSpec((C, D), c2),                            # wp_t (bf16)
        pl.BlockSpec((1, D), c2),                            # bp
        pl.BlockSpec((1, D), c2),                            # x_r
        pl.BlockSpec((D, D), c2),                            # wk_t (bf16)
        pl.BlockSpec((1, D), c2),                            # bk
        pl.BlockSpec((D, D), c2),                            # wv_t (bf16)
        pl.BlockSpec((1, D), c2),                            # bv
    ]
    out_specs = [
        pl.BlockSpec((tile_b, S, D), lambda i: (i, 0, 0)),
        pl.BlockSpec((tile_b, S, D), lambda i: (i, 0, 0)),
    ]
    return pl.pallas_call(
        _encode_kernel,
        out_shape=(jax.ShapeDtypeStruct((B, S, D), jnp.bfloat16),
                   jax.ShapeDtypeStruct((B, S, D), jnp.bfloat16)),
        grid_spec=pltpu.PrefetchScalarGridSpec(
            num_scalar_prefetch=0, grid=grid,
            in_specs=in_specs, out_specs=out_specs),
        compiler_params=pltpu.CompilerParams(
            dimension_semantics=("parallel",),
            vmem_limit_bytes=_VMEM_LIMIT),
    )(y_pad,
      p["wp_t"].astype(jnp.bfloat16), p["bp"], p["xr"],
      p["wk_t"].astype(jnp.bfloat16), p["bk"],
      p["wv_t"].astype(jnp.bfloat16), p["bv"])


# ---------------------------------------------------------------------------
# Kernel 2: the whole session loop.
# grid = (batch_tiles, session_iters); session axis last (sequential carry).
# ---------------------------------------------------------------------------
def _step_kernel(l_scale, n_keys,
                 xt0_ref, k_ref, v_ref,
                 wq_ref, bq_ref, g_ref, beta_ref,
                 w1_ref, b1_ref, w2_ref, b2_ref,
                 hw_ref, hb_ref,
                 out_ref, xt_ref):
    f32 = jnp.float32
    bf16 = jnp.bfloat16
    i = pl.program_id(1)                      # session iteration (innermost)

    @pl.when(i == 0)
    def _init():
        # x_t = self.x_t.unsqueeze(0).expand(B, -1), re-fires per batch tile.
        xt_ref[...] = jnp.broadcast_to(xt0_ref[...], xt_ref.shape)

    x_t = xt_ref[...]                                                 # (TB, D)

    # Q = W_q(x_t); fold the 1/sqrt(l) score scale into Q once.
    q = (jnp.dot(x_t.astype(bf16), wq_ref[...], preferred_element_type=f32)
         + bq_ref[...]) * l_scale                                     # (TB, D)

    # Single-query attention over the padded key set (MXU contractions);
    # softmax math on dense 2-D arrays, pad keys masked out.
    s = jnp.einsum('bqd,bkd->bqk', q[:, None, :].astype(bf16), k_ref[...],
                   preferred_element_type=f32)[:, 0, :]               # (TB, S)
    key_idx = jax.lax.broadcasted_iota(jnp.int32, s.shape, 1)
    s = jnp.where(key_idx < n_keys, s, jnp.float32(-1e30))
    m = jnp.max(s, axis=-1, keepdims=True)
    p = jnp.exp(s - m)
    denom = jnp.sum(p, axis=-1, keepdims=True)
    z = jnp.einsum('bqk,bkd->bqd', p[:, None, :].astype(bf16), v_ref[...],
                   preferred_element_type=f32)[:, 0, :]               # (TB, D)
    z = z / denom                              # exact softmax normalisation

    gamma = g_ref[...]
    beta = beta_ref[...]

    def layer_norm(v):                 # same self.norm reused for z and e_1
        mu = jnp.mean(v, axis=-1, keepdims=True)
        var = jnp.mean((v - mu) ** 2, axis=-1, keepdims=True)
        return (v - mu) * jax.lax.rsqrt(var + 1e-5) * gamma + beta

    e1 = x_t + layer_norm(z)
    hh = layer_norm(e1).astype(bf16)
    h1 = jnp.maximum(
        jnp.dot(hh, w1_ref[...], preferred_element_type=f32) + b1_ref[...], 0.0)
    e = e1 + jnp.dot(h1.astype(bf16), w2_ref[...],
                     preferred_element_type=f32) + b2_ref[...]

    xt_ref[...] = e                    # carry x_t to the next session iteration

    # Classification head i only: its own (D, pad_w) weight slice, plain
    # lane-dense store of this iteration's block (no masked RMW).
    logits = (jnp.dot(e.astype(bf16), hw_ref[...], preferred_element_type=f32)
              + hb_ref[...])                                          # (TB, pad_w)
    out_ref[...] = logits.astype(out_ref.dtype)


def mlcil_forward(params, x, session_idx, l):
    """ICABasedMLCIL.forward: x (B, N, C) -> (B, sum(num_classes[:session_idx+1]))."""
    B, N, C = x.shape
    D = params["x_t"].shape[-1]
    num_iters = session_idx + 1
    n_keys = N + 1
    seq_pad = _round_up(n_keys, _SEQ_ALIGN)
    l_scale = 1.0 / math.sqrt(float(l))

    # Faithful to the reference: only ica_modules[session_idx] is ever used.
    ica_p = params["ica_modules"][session_idx]

    # --- x_t-independent precompute, once per forward -----------------------
    K, V = ica_encode(x, ica_p, seq_pad)                 # (B, seq_pad, D) bf16

    # --- heads 0..session_idx, padded to lane-dense 128-multiple slots ------
    heads = params["heads"][:num_iters]
    widths = [int(w.shape[1]) for (w, _) in heads]
    pad_w = _round_up(max(widths), _LANE)
    head_w = jnp.concatenate(
        [jnp.pad(w, ((0, 0), (0, pad_w - w.shape[1]))) for (w, _) in heads],
        axis=1).astype(jnp.bfloat16)                     # (D, num_iters*pad_w)
    head_b = jnp.concatenate(
        [jnp.pad(b, ((0, 0), (0, pad_w - b.shape[1]))) for (_, b) in heads],
        axis=1)                                          # (1, num_iters*pad_w)

    tile_b = _pick_batch_tile(
        B, bytes_per_row=(4 * seq_pad * D * 2 + 8 * D * 4
                          + 4 * seq_pad * 4 + 4 * pad_w * 4))

    c2 = lambda b, i: (0, 0)
    in_specs = [
        pl.BlockSpec((1, D), c2),                                     # x_t init
        pl.BlockSpec((tile_b, seq_pad, D), lambda b, i: (b, 0, 0)),   # K
        pl.BlockSpec((tile_b, seq_pad, D), lambda b, i: (b, 0, 0)),   # V
        pl.BlockSpec((D, D), c2),                                     # wq_t
        pl.BlockSpec((1, D), c2),                                     # bq
        pl.BlockSpec((1, D), c2),                                     # ln gamma
        pl.BlockSpec((1, D), c2),                                     # ln beta
        pl.BlockSpec((D, D), c2),                                     # w1_t
        pl.BlockSpec((1, D), c2),                                     # b1
        pl.BlockSpec((D, D), c2),                                     # w2_t
        pl.BlockSpec((1, D), c2),                                     # b2
        pl.BlockSpec((D, pad_w), lambda b, i: (0, i)),                # head-i W
        pl.BlockSpec((1, pad_w), lambda b, i: (0, i)),                # head-i b
    ]
    out_specs = pl.BlockSpec((tile_b, pad_w), lambda b, i: (b, i))

    out_pad = pl.pallas_call(
        functools.partial(_step_kernel, l_scale, n_keys),
        out_shape=jax.ShapeDtypeStruct((B, num_iters * pad_w), jnp.float32),
        grid_spec=pltpu.PrefetchScalarGridSpec(
            num_scalar_prefetch=0,
            grid=(pl.cdiv(B, tile_b), num_iters),   # session axis LAST
            in_specs=in_specs,
            out_specs=out_specs,
            scratch_shapes=[pltpu.VMEM((tile_b, D), jnp.float32)]),
        compiler_params=pltpu.CompilerParams(
            dimension_semantics=("parallel", "arbitrary"),
            vmem_limit_bytes=_VMEM_LIMIT),
    )(params["x_t"], K, V,
      ica_p["wq_t"].astype(jnp.bfloat16), ica_p["bq"],
      ica_p["ln_g"], ica_p["ln_b"],
      ica_p["w1_t"].astype(jnp.bfloat16), ica_p["b1"],
      ica_p["w2_t"].astype(jnp.bfloat16), ica_p["b2"],
      head_w, head_b)

    # Un-pad: keep each head's true num_classes columns, in session order.
    pieces = [jax.lax.slice_in_dim(out_pad, i * pad_w, i * pad_w + widths[i], axis=1)
              for i in range(num_iters)]
    return jnp.concatenate(pieces, axis=1)


# ---------------------------------------------------------------------------
# Parameter init.  All Linear weights stored pre-transposed as (in, out);
# 1-D params stored as (1, D) rows.  (Equivalent to PyTorch nn.Linear up to the
# storage layout of the random weights.)
# ---------------------------------------------------------------------------
def init_params(key, c, d, num_classes_list):
    keys = iter(jax.random.split(key, 128))

    def nrm(shape, scale=0.1):
        return jax.random.normal(next(keys), shape, dtype=jnp.float32) * scale

    def one_ica():
        return {
            "wp_t": nrm((c, d)), "bp": nrm((1, d)),
            "xr": nrm((1, d), 1.0),
            "wq_t": nrm((d, d)), "bq": nrm((1, d)),
            "wk_t": nrm((d, d)), "bk": nrm((1, d)),
            "wv_t": nrm((d, d)), "bv": nrm((1, d)),
            # TODO(synk): W_o is declared in the PyTorch module but never used
            # in forward(), so it is intentionally not instantiated.
            "ln_g": jnp.ones((1, d), jnp.float32),
            "ln_b": jnp.zeros((1, d), jnp.float32),
            "w1_t": nrm((d, d)), "b1": nrm((1, d)),
            "w2_t": nrm((d, d)), "b2": nrm((1, d)),
        }

    return {
        "x_t": nrm((1, d), 1.0),
        "ica_modules": [one_ica() for _ in num_classes_list],
        "heads": [(nrm((d, nc)), nrm((1, nc))) for nc in num_classes_list],
    }


if __name__ == "__main__":
    B, N, C, D, H, L = 2, 8, 4, 32, 4, 32   # H is unused by forward (as in PyTorch)
    num_classes_list = [5, 6, 7]
    session_idx = 2

    key = jax.random.PRNGKey(0)
    k_params, k_x = jax.random.split(key)
    params = init_params(k_params, C, D, num_classes_list)
    x = jax.random.normal(k_x, (B, N, C), dtype=jnp.float32)

    out = mlcil_forward(params, x, session_idx, L)
    out = jax.block_until_ready(out)

    expected_cols = sum(num_classes_list[: session_idx + 1])
    assert out.shape == (B, expected_cols), out.shape
    assert jnp.all(jnp.isfinite(out))
    print("KERNEL_OK")
</pallas_src>

<mosaic_0001>
module attributes {stable_mosaic.version = 11 : i64} {
  func.func @_encode_kernel(%arg0: i32, %arg1: memref<2x16x4xbf16, #tpu.memory_space<vmem>>, %arg2: memref<4x32xbf16, #tpu.memory_space<vmem>>, %arg3: memref<1x32xf32, #tpu.memory_space<vmem>>, %arg4: memref<1x32xf32, #tpu.memory_space<vmem>>, %arg5: memref<32x32xbf16, #tpu.memory_space<vmem>>, %arg6: memref<1x32xf32, #tpu.memory_space<vmem>>, %arg7: memref<32x32xbf16, #tpu.memory_space<vmem>>, %arg8: memref<1x32xf32, #tpu.memory_space<vmem>>, %arg9: memref<2x16x32xbf16, #tpu.memory_space<vmem>>, %arg10: memref<2x16x32xbf16, #tpu.memory_space<vmem>>) attributes {dimension_semantics = [#tpu.dimension_semantics<parallel>], iteration_bounds = array<i64: 1>, scalar_prefetch = 0 : i64, scratch_operands = 0 : i64, tpu.core_type = #tpu.core_type<tc>, window_params = [{transform_indices = @transform_0, window_bounds = array<i64: 2, 16, 4>}, {pipeline_mode = #tpu.pipeline_mode<synchronous>, transform_indices = @transform_1, window_bounds = array<i64: 4, 32>}, {pipeline_mode = #tpu.pipeline_mode<synchronous>, transform_indices = @transform_2, window_bounds = array<i64: 1, 32>}, {pipeline_mode = #tpu.pipeline_mode<synchronous>, transform_indices = @transform_3, window_bounds = array<i64: 1, 32>}, {pipeline_mode = #tpu.pipeline_mode<synchronous>, transform_indices = @transform_4, window_bounds = array<i64: 32, 32>}, {pipeline_mode = #tpu.pipeline_mode<synchronous>, transform_indices = @transform_5, window_bounds = array<i64: 1, 32>}, {pipeline_mode = #tpu.pipeline_mode<synchronous>, transform_indices = @transform_6, window_bounds = array<i64: 32, 32>}, {pipeline_mode = #tpu.pipeline_mode<synchronous>, transform_indices = @transform_7, window_bounds = array<i64: 1, 32>}, {transform_indices = @transform_8, window_bounds = array<i64: 2, 16, 32>}, {transform_indices = @transform_9, window_bounds = array<i64: 2, 16, 32>}]} {
    %c0 = arith.constant 0 : index
    %c0_0 = arith.constant 0 : index
    %c0_1 = arith.constant 0 : index
    %0 = vector.load %arg1[%c0, %c0_0, %c0_1] : memref<2x16x4xbf16, #tpu.memory_space<vmem>>, vector<2x16x4xbf16>
    %1 = vector.shape_cast %0 : vector<2x16x4xbf16> to vector<32x4xbf16>
    %c0_2 = arith.constant 0 : index
    %c0_3 = arith.constant 0 : index
    %2 = vector.load %arg2[%c0_2, %c0_3] : memref<4x32xbf16, #tpu.memory_space<vmem>>, vector<4x32xbf16>
    %cst = arith.constant dense<0.000000e+00> : vector<32x32xf32>
    %3 = tpu.matmul %1, %2, %cst {dimension_numbers = #tpu.dot_dimension_numbers<[1], [0], [0], [1], [0, 0, 1, 1], [], []>} : vector<32x4xbf16>, vector<4x32xbf16>, vector<32x32xf32> -> vector<32x32xf32>
    %c0_4 = arith.constant 0 : index
    %c0_5 = arith.constant 0 : index
    %4 = vector.load %arg3[%c0_4, %c0_5] : memref<1x32xf32, #tpu.memory_space<vmem>>, vector<1x32xf32>
    %5 = vector.broadcast %4 : vector<1x32xf32> to vector<32x32xf32>
    %6 = arith.addf %3, %5 : vector<32x32xf32>
    %7 = vector.shape_cast %6 : vector<32x32xf32> to vector<2x16x32xf32>
    %8 = tpu.iota {dimensions = array<i32: 1>} : vector<2x16x32xi32>
    %c0_6 = arith.constant 0 : index
    %c0_7 = arith.constant 0 : index
    %9 = vector.load %arg4[%c0_6, %c0_7] : memref<1x32xf32, #tpu.memory_space<vmem>>, vector<1x32xf32>
    %10 = vector.shape_cast %9 : vector<1x32xf32> to vector<1x1x32xf32>
    %11 = vector.shape_cast %10 : vector<1x1x32xf32> to vector<1x1x32xf32>
    %12 = vector.broadcast %11 : vector<1x1x32xf32> to vector<2x16x32xf32>
    %c0_i32 = arith.constant 0 : i32
    %13 = vector.broadcast %c0_i32 : i32 to vector<2x16x32xi32>
    %14 = arith.cmpi eq, %8, %13 : vector<2x16x32xi32>
    %15 = arith.select %14, %12, %7 : vector<2x16x32xi1>, vector<2x16x32xf32>
    %16 = vector.shape_cast %15 : vector<2x16x32xf32> to vector<32x32xf32>
    %17 = arith.truncf %16 : vector<32x32xf32> to vector<32x32xbf16>
    %c0_8 = arith.constant 0 : index
    %c0_9 = arith.constant 0 : index
    %18 = vector.load %arg5[%c0_8, %c0_9] : memref<32x32xbf16, #tpu.memory_space<vmem>>, vector<32x32xbf16>
    %cst_10 = arith.constant dense<0.000000e+00> : vector<32x32xf32>
    %19 = tpu.matmul %17, %18, %cst_10 {dimension_numbers = #tpu.dot_dimension_numbers<[1], [0], [0], [1], [0, 0, 1, 1], [], []>} : vector<32x32xbf16>, vector<32x32xbf16>, vector<32x32xf32> -> vector<32x32xf32>
    %c0_11 = arith.constant 0 : index
    %c0_12 = arith.constant 0 : index
    %20 = vector.load %arg6[%c0_11, %c0_12] : memref<1x32xf32, #tpu.memory_space<vmem>>, vector<1x32xf32>
    %21 = vector.broadcast %20 : vector<1x32xf32> to vector<32x32xf32>
    %22 = arith.addf %19, %21 : vector<32x32xf32>
    %c0_13 = arith.constant 0 : index
    %c0_14 = arith.constant 0 : index
    %23 = vector.load %arg7[%c0_13, %c0_14] : memref<32x32xbf16, #tpu.memory_space<vmem>>, vector<32x32xbf16>
    %cst_15 = arith.constant dense<0.000000e+00> : vector<32x32xf32>
    %24 = tpu.matmul %17, %23, %cst_15 {dimension_numbers = #tpu.dot_dimension_numbers<[1], [0], [0], [1], [0, 0, 1, 1], [], []>} : vector<32x32xbf16>, vector<32x32xbf16>, vector<32x32xf32> -> vector<32x32xf32>
    %c0_16 = arith.constant 0 : index
    %c0_17 = arith.constant 0 : index
    %25 = vector.load %arg8[%c0_16, %c0_17] : memref<1x32xf32, #tpu.memory_space<vmem>>, vector<1x32xf32>
    %26 = vector.broadcast %25 : vector<1x32xf32> to vector<32x32xf32>
    %27 = arith.addf %24, %26 : vector<32x32xf32>
    %28 = vector.shape_cast %22 : vector<32x32xf32> to vector<2x16x32xf32>
    %29 = arith.truncf %28 : vector<2x16x32xf32> to vector<2x16x32xbf16>
    %c0_18 = arith.constant 0 : index
    %c0_19 = arith.constant 0 : index
    %c0_20 = arith.constant 0 : index
    %30 = vector.load %arg9[%c0_18, %c0_19, %c0_20] : memref<2x16x32xbf16, #tpu.memory_space<vmem>>, vector<2x16x32xbf16>
    tpu.vector_store %arg9[%c0_18, %c0_19, %c0_20], %29 {strides = array<i32>} : memref<2x16x32xbf16, #tpu.memory_space<vmem>>, vector<2x16x32xbf16>,
    %31 = vector.shape_cast %27 : vector<32x32xf32> to vector<2x16x32xf32>
    %32 = arith.truncf %31 : vector<2x16x32xf32> to vector<2x16x32xbf16>
    %c0_21 = arith.constant 0 : index
    %c0_22 = arith.constant 0 : index
    %c0_23 = arith.constant 0 : index
    %33 = vector.load %arg10[%c0_21, %c0_22, %c0_23] : memref<2x16x32xbf16, #tpu.memory_space<vmem>>, vector<2x16x32xbf16>
    tpu.vector_store %arg10[%c0_21, %c0_22, %c0_23], %32 {strides = array<i32>} : memref<2x16x32xbf16, #tpu.memory_space<vmem>>, vector<2x16x32xbf16>,
    return
  }
  func.func @transform_0(%arg0: i32) -> (i32, i32, i32) {
    %c0_i32 = arith.constant 0 : i32
    %c0_i32_0 = arith.constant 0 : i32
    %c0_i32_1 = arith.constant 0 : i32
    return %arg0, %c0_i32, %c0_i32_0 : i32, i32, i32
  }
  func.func @transform_1(%arg0: i32) -> (i32, i32) {
    %c0_i32 = arith.constant 0 : i32
    %c0_i32_0 = arith.constant 0 : i32
    %c0_i32_1 = arith.constant 0 : i32
    return %c0_i32, %c0_i32_0 : i32, i32
  }
  func.func @transform_2(%arg0: i32) -> (i32, i32) {
    %c0_i32 = arith.constant 0 : i32
    %c0_i32_0 = arith.constant 0 : i32
    %c0_i32_1 = arith.constant 0 : i32
    return %c0_i32, %c0_i32_0 : i32, i32
  }
  func.func @transform_3(%arg0: i32) -> (i32, i32) {
    %c0_i32 = arith.constant 0 : i32
    %c0_i32_0 = arith.constant 0 : i32
    %c0_i32_1 = arith.constant 0 : i32
    return %c0_i32, %c0_i32_0 : i32, i32
  }
  func.func @transform_4(%arg0: i32) -> (i32, i32) {
    %c0_i32 = arith.constant 0 : i32
    %c0_i32_0 = arith.constant 0 : i32
    %c0_i32_1 = arith.constant 0 : i32
    return %c0_i32, %c0_i32_0 : i32, i32
  }
  func.func @transform_5(%arg0: i32) -> (i32, i32) {
    %c0_i32 = arith.constant 0 : i32
    %c0_i32_0 = arith.constant 0 : i32
    %c0_i32_1 = arith.constant 0 : i32
    return %c0_i32, %c0_i32_0 : i32, i32
  }
  func.func @transform_6(%arg0: i32) -> (i32, i32) {
    %c0_i32 = arith.constant 0 : i32
    %c0_i32_0 = arith.constant 0 : i32
    %c0_i32_1 = arith.constant 0 : i32
    return %c0_i32, %c0_i32_0 : i32, i32
  }
  func.func @transform_7(%arg0: i32) -> (i32, i32) {
    %c0_i32 = arith.constant 0 : i32
    %c0_i32_0 = arith.constant 0 : i32
    %c0_i32_1 = arith.constant 0 : i32
    return %c0_i32, %c0_i32_0 : i32, i32
  }
  func.func @transform_8(%arg0: i32) -> (i32, i32, i32) {
    %c0_i32 = arith.constant 0 : i32
    %c0_i32_0 = arith.constant 0 : i32
    %c0_i32_1 = arith.constant 0 : i32
    return %arg0, %c0_i32, %c0_i32_0 : i32, i32, i32
  }
  func.func @transform_9(%arg0: i32) -> (i32, i32, i32) {
    %c0_i32 = arith.constant 0 : i32
    %c0_i32_0 = arith.constant 0 : i32
    %c0_i32_1 = arith.constant 0 : i32
    return %arg0, %c0_i32, %c0_i32_0 : i32, i32, i32
  }
}

</mosaic_0001>

<llo_original>
// kernel: tpu_custom_call.1
$region0: #{tpu_custom_call.1}
  #allocation0 [shape = 'u32[]', space=smem, size = 0x4, offset = 0x4, fixed_abs, tag = 'smem constant byte address 0x4 - core index']
  #allocation1 [shape = 'u32[144,128]{1,0:T(1,128)}', space=vmem, size = 0x12000, scoped, tag = 'internal scratch']
  %s0 = inlined_call_operand.vmem [shape: bf16[2,16,4], index: 0, kind: input, shape index: {}]
  %s1 = inlined_call_operand.vmem [shape: bf16[4,32], index: 1, kind: input, shape index: {}]
  %s2 = inlined_call_operand.vmem [shape: f32[1,32], index: 2, kind: input, shape index: {}]
  %s3 = inlined_call_operand.vmem [shape: f32[1,32], index: 3, kind: input, shape index: {}]
  %s4 = inlined_call_operand.vmem [shape: bf16[32,32], index: 4, kind: input, shape index: {}]
  %s5 = inlined_call_operand.vmem [shape: f32[1,32], index: 5, kind: input, shape index: {}]
  %s6 = inlined_call_operand.hbm [shape: bf16[32,32], index: 6, kind: input, shape index: {}]
  %s7 = inlined_call_operand.vmem [shape: f32[1,32], index: 7, kind: input, shape index: {}]
  %s8 = inlined_call_operand.hbm [shape: bf16[2,16,32], index: 8, kind: output, shape index: {0}]
  %s9 = inlined_call_operand.hbm [shape: bf16[2,16,32], index: 9, kind: output, shape index: {1}]
  %10 = xla_tuple %s8, %s9
  %s11 = sld [smem:[#allocation0]]
  $region54: #{tpu_custom_call.1} parent=0
    _
  %s13 = ssub.s32 1, %s11
  %s14 = scalar_select 0, %s13, %s11
  $region1: #{tpu_custom_call.1} parent=0
    #allocation2 [shape = 'u8[8192]{0}', space=vmem, size = 0x2000, scoped, tag = 'input window, operand 6, single buffered']
    #allocation3 [shape = 's32[1]{0}', space=sflag, size = 0x4, scoped, tag = 'scoped memory for tpu_custom_call.1']
    #allocation4 [shape = 's32[1]{0}', space=sflag, size = 0x4, scoped, tag = 'scoped memory for tpu_custom_call.1']
    #allocation5 [shape = 'u8[8192]{0}', space=vmem, size = 0x2000, scoped, tag = 'output window, operand 0, single buffered']
    #allocation6 [shape = 'u8[8192]{0}', space=vmem, size = 0x2000, scoped, tag = 'output window, operand 1, single buffered']
    #allocation7 [shape = 's32[1]{0}', space=sflag, size = 0x4, scoped, tag = 'scoped memory for tpu_custom_call.1']
    %15 = vsyncpa [#allocation3], 0
    %16 = vsyncpa [#allocation4], 0
    %17 = vsyncpa [#allocation7], 0
    // Predicated region
    $region2: #{tpu_custom_call.1} parent=1 // pred_check
      _
    $region3: #{tpu_custom_call.1} parent=1 // pred_check_branch
      %19 = sbr.rel (0) target = $region5
    $region4: #{tpu_custom_call.1} parent=1 // pred_region
      _
    $region5: #{tpu_custom_call.1} parent=1 // pred_fallthru
      _
    // Predicated region
    $region6: #{tpu_custom_call.1} parent=1 // pred_check
      _
    $region7: #{tpu_custom_call.1} parent=1 // pred_check_branch
      %21 = sbr.rel (0) target = $region9
    $region8: #{tpu_custom_call.1} parent=1 // pred_region
      _
    $region9: #{tpu_custom_call.1} parent=1 // pred_fallthru
      _
    // Predicated region
    $region10: #{tpu_custom_call.1} parent=1 // pred_check
      _
    $region11: #{tpu_custom_call.1} parent=1 // pred_check_branch
      %23 = sbr.rel (0) target = $region13
    $region12: #{tpu_custom_call.1} parent=1 // pred_region
      _
    $region13: #{tpu_custom_call.1} parent=1 // pred_fallthru
      _
    // Predicated region
    $region14: #{tpu_custom_call.1} parent=1 // pred_check
      _
    $region15: #{tpu_custom_call.1} parent=1 // pred_check_branch
      %25 = sbr.rel (0) target = $region17
    $region16: #{tpu_custom_call.1} parent=1 // pred_region
      _
    $region17: #{tpu_custom_call.1} parent=1 // pred_fallthru
      _
    // Predicated region
    $region18: #{tpu_custom_call.1} parent=1 // pred_check
      _
    $region19: #{tpu_custom_call.1} parent=1 // pred_check_branch
      %27 = sbr.rel (0) target = $region21
    $region20: #{tpu_custom_call.1} parent=1 // pred_region
      _
    $region21: #{tpu_custom_call.1} parent=1 // pred_fallthru
      _
    // Predicated region
    $region22: #{tpu_custom_call.1} parent=1 // pred_check
      _
    $region23: #{tpu_custom_call.1} parent=1 // pred_check_branch
      %29 = sbr.rel (0) target = $region25
    $region24: #{tpu_custom_call.1} parent=1 // pred_region
      _
    $region25: #{tpu_custom_call.1} parent=1 // pred_fallthru
      _
    // Predicated region
    $region26: #{tpu_custom_call.1} parent=1 // pred_check
      _
    $region27: #{tpu_custom_call.1} parent=1 // pred_check_branch
      %31 = sbr.rel (0) target = $region29
    $region28: #{tpu_custom_call.1} parent=1 // pred_region
      %s33 = ssub.s32 256, 256
      %34 = vsyncadd [#allocation3], %s33
      %s35 = sshll.u32 [#allocation2], 4
      %s36 = int_to_ptr.vmem [resolvable:$true] %s35
      %41 = dma.hbm_to_vmem [thread:$0]  %s6, 256, %s36, [#allocation3], 64, 64, 4
    $region29: #{tpu_custom_call.1} parent=1 // pred_fallthru
      _
    // Predicated region
    $region30: #{tpu_custom_call.1} parent=1 // pred_check
      _
    $region31: #{tpu_custom_call.1} parent=1 // pred_check_branch
      %43 = sbr.rel (0) target = $region33
    $region32: #{tpu_custom_call.1} parent=1 // pred_region
      _
    $region33: #{tpu_custom_call.1} parent=1 // pred_fallthru
      _
    // Predicated region
    $region34: #{tpu_custom_call.1} parent=1 // pred_check
      _
    $region35: #{tpu_custom_call.1} parent=1 // pred_check_branch
      %45 = sbr.rel (0) target = $region37
    $region36: #{tpu_custom_call.1} parent=1 // pred_region
      %46 = dma.done [#allocation3], 256
    $region37: #{tpu_custom_call.1} parent=1 // pred_fallthru
      _
    %v48 = vld [vmem:[%s0] sm:$0xf]
    %v49 = vld [vmem:[%s0 + $0x4] sm:$0xf]
    %v50 = vld [vmem:[%s0 + $0x8] sm:$0xf]
    %v51 = vld [vmem:[%s0 + $0xc] sm:$0xf]
    %v52 = vld [vmem:[%s1] sm:$0x3]
    %v53 = vld [vmem:[%s2] sm:$0x1]
    %v55 = vlaneseq
    %v56 = vshrl.u32 %v55, 7
    %v57 = vsub.s32 0, %v56
    %v58 = vrot.slane %v53, %v57
    %v64 = vunpack.c.l.b16 %v48
    %v65 = vunpack.c.l.b16 %v49
    %v66 = vunpack.c.l.b16 %v50
    %v67 = vunpack.c.l.b16 %v51
    %v68 = vpack.c.b16 %v65, %v64
    %v69 = vpack.c.b16 %v67, %v66
    %vm70 = vcmask 31744
    %v72 = vsel %vm70, %v68, 0
    %v75 = vsel %vm70, %v69, 0
    %vm77 = vcmask 1041408
    %v79 = vsel %vm77, %v52, 0
    %81 = vmatprep.subr.bf16.mxu0 0
    %82 = vmatpush1.bf16.msra.mxu0 0
    %83 = vmatprep.subr.bf16.mxu0 0
    %84 = vmatpush1.bf16.msra.mxu0 0
    %85 = vmatprep.subr.bf16.mxu0 0
    %86 = vmatpush1.bf16.msra.mxu0 0
    %87 = vmatprep.subr.bf16.mxu0 0
    %88 = vmatpush1.bf16.msra.mxu0 0
    %89 = vmatprep.subr.bf16.mxu0 0
    %90 = vmatpush1.bf16.msra.mxu0 0
    %91 = vmatprep.subr.bf16.mxu0 0
    %92 = vmatpush1.bf16.msra.mxu0 0
    %93 = vmatprep.subr.bf16.mxu0 0
    %94 = vmatpush1.bf16.msra.mxu0 0
    %95 = vmatprep.subr.bf16.mxu0 0
    %96 = vmatpush1.bf16.msra.mxu0 %v79
    %97 = vmatprep.subr.bf16.mxu0 0
    %98 = vmatpush2.bf16.msra.mxu0 0
    %99 = vmatprep.subr.bf16.mxu0 0
    %100 = vmatpush2.bf16.msra.mxu0 0
    %101 = vmatprep.subr.bf16.mxu0 0
    %102 = vmatpush2.bf16.msra.mxu0 0
    %103 = vmatprep.subr.bf16.mxu0 0
    %104 = vmatpush2.bf16.msra.mxu0 0
    %105 = vmatprep.subr.bf16.mxu0 0
    %106 = vmatpush2.bf16.msra.mxu0 0
    %107 = vmatprep.subr.bf16.mxu0 0
    %108 = vmatpush2.bf16.msra.mxu0 0
    %109 = vmatprep.subr.bf16.mxu0 0
    %110 = vmatpush2.bf16.msra.mxu0 0
    %111 = vmatprep.subr.bf16.mxu0 0
    %112 = vmatpush2.bf16.msra.mxu0 0
    %113 = vmatprep.mubr.bf16.mxu0 0
    %114 = vmatmul.mubr.bf16.gmra.mxu0 %v72
    %v115 = vpop.f32.mrf.mxu0
    %v116 = vadd.f32 %v58, %v115
    %v117 = vpop.f32.mrf.mxu0
    %v118 = vpop.f32.mrf.mxu0
    %v119 = vadd.f32 %v58, %v118
    %v120 = vpop.f32.mrf.mxu0
    %121 = vmatprep.mubr.bf16.mxu0 0
    %122 = vmatmul.mubr.bf16.gmra.mxu0 %v75
    %v123 = vpop.f32.mrf.mxu0
    %v124 = vadd.f32 %v58, %v123
    %v125 = vpop.f32.mrf.mxu0
    %v126 = vpop.f32.mrf.mxu0
    %v127 = vadd.f32 %v58, %v126
    %v128 = vpop.f32.mrf.mxu0
    %129 = vdwg.mxu0
    %v130 = vlaneseq
    %v131 = vshrl.u32 %v130, 7
    %v132 = vadd.s32 %v131, 8
    %v133 = vld [vmem:[%s3] sm:$0x1]
    %v135 = vlaneseq
    %v136 = vshrl.u32 %v135, 7
    %v137 = vsub.s32 0, %v136
    %v138 = vrot.slane %v133, %v137
    %vm140 = vcmp.eq.s32.totalorder %v131, 0
    %vm141 = vcmp.eq.s32.totalorder %v132, 0
    %v142 = vsel %vm140, %v138, %v116
    %v143 = vsel %vm141, %v138, %v119
    %v144 = vsel %vm140, %v138, %v124
    %v145 = vsel %vm141, %v138, %v127
    %v146 = vpack.c.bf16 %v143, %v142
    %v147 = vpack.c.bf16 %v145, %v144
    %v148 = vld [vmem:[%s4] sm:$0xf]
    %v149 = vld [vmem:[%s4 + $0x4] sm:$0xf]
    %v150 = vld [vmem:[%s4 + $0x8] sm:$0xf]
    %v151 = vld [vmem:[%s4 + $0xc] sm:$0xf]
    %v152 = vld [vmem:[%s5] sm:$0x1]
    %v154 = vlaneseq
    %v155 = vshrl.u32 %v154, 7
    %v156 = vsub.s32 0, %v155
    %v157 = vrot.slane %v152, %v156
    %v163 = vunpack.c.l.b16 %v148
    %v164 = vunpack.c.l.b16 %v149
    %v165 = vunpack.c.l.b16 %v150
    %v166 = vunpack.c.l.b16 %v151
    %v167 = vpack.c.b16 %v164, %v163
    %v168 = vpack.c.b16 %v166, %v165
    %vm171 = vcmask 261120
    %v173 = vsel %vm171, %v146, 0
    %v176 = vsel %vm171, %v147, 0
    %178 = vmatprep.subr.bf16.mxu0 0
    %179 = vmatpush1.bf16.msra.mxu0 0
    %180 = vmatprep.subr.bf16.mxu0 0
    %181 = vmatpush1.bf16.msra.mxu0 0
    %182 = vmatprep.subr.bf16.mxu0 0
    %183 = vmatpush1.bf16.msra.mxu0 0
    %184 = vmatprep.subr.bf16.mxu0 0
    %185 = vmatpush1.bf16.msra.mxu0 0
    %186 = vmatprep.subr.bf16.mxu0 0
    %187 = vmatpush1.bf16.msra.mxu0 0
    %188 = vmatprep.subr.bf16.mxu0 0
    %189 = vmatpush1.bf16.msra.mxu0 0
    %190 = vmatprep.subr.bf16.mxu0 0
    %191 = vmatpush1.bf16.msra.mxu0 %v168
    %192 = vmatprep.subr.bf16.mxu0 0
    %193 = vmatpush1.bf16.msra.mxu0 %v167
    %194 = vmatprep.subr.bf16.mxu0 0
    %195 = vmatpush2.bf16.msra.mxu0 0
    %196 = vmatprep.subr.bf16.mxu0 0
    %197 = vmatpush2.bf16.msra.mxu0 0
    %198 = vmatprep.subr.bf16.mxu0 0
    %199 = vmatpush2.bf16.msra.mxu0 0
    %200 = vmatprep.subr.bf16.mxu0 0
    %201 = vmatpush2.bf16.msra.mxu0 0
    %202 = vmatprep.subr.bf16.mxu0 0
    %203 = vmatpush2.bf16.msra.mxu0 0
    %204 = vmatprep.subr.bf16.mxu0 0
    %205 = vmatpush2.bf16.msra.mxu0 0
    %206 = vmatprep.subr.bf16.mxu0 0
    %207 = vmatpush2.bf16.msra.mxu0 0
    %208 = vmatprep.subr.bf16.mxu0 0
    %209 = vmatpush2.bf16.msra.mxu0 0
    %210 = vmatprep.mubr.bf16.mxu0 0
    %211 = vmatmul.mubr.bf16.gmra.mxu0 %v173
    %v212 = vpop.f32.mrf.mxu0
    %v213 = vadd.f32 %v157, %v212
    %v214 = vpop.f32.mrf.mxu0
    %v215 = vpop.f32.mrf.mxu0
    %v216 = vadd.f32 %v157, %v215
    %v217 = vpop.f32.mrf.mxu0
    %218 = vmatprep.mubr.bf16.mxu0 0
    %219 = vmatmul.mubr.bf16.gmra.mxu0 %v176
    %v220 = vpop.f32.mrf.mxu0
    %v221 = vadd.f32 %v157, %v220
    %v222 = vpop.f32.mrf.mxu0
    %v223 = vpop.f32.mrf.mxu0
    %v224 = vadd.f32 %v157, %v223
    %v225 = vpop.f32.mrf.mxu0
    %226 = vdwg.mxu0
    %v227 = vld [vmem:[#allocation2] sm:$0xf]
    %v228 = vld [vmem:[#allocation2 + $0x4] sm:$0xf]
    %v229 = vld [vmem:[#allocation2 + $0x8] sm:$0xf]
    %v230 = vld [vmem:[#allocation2 + $0xc] sm:$0xf]
    %v231 = vld [vmem:[%s7] sm:$0x1]
    %v233 = vlaneseq
    %v234 = vshrl.u32 %v233, 7
    %v235 = vsub.s32 0, %v234
    %v236 = vrot.slane %v231, %v235
    %v242 = vunpack.c.l.b16 %v227
    %v243 = vunpack.c.l.b16 %v228
    %v244 = vunpack.c.l.b16 %v229
    %v245 = vunpack.c.l.b16 %v230
    %v246 = vpack.c.b16 %v243, %v242
    %v247 = vpack.c.b16 %v245, %v244
    %250 = vmatprep.subr.bf16.mxu0 0
    %251 = vmatpush1.bf16.msra.mxu0 0
    %252 = vmatprep.subr.bf16.mxu0 0
    %253 = vmatpush1.bf16.msra.mxu0 0
    %254 = vmatprep.subr.bf16.mxu0 0
    %255 = vmatpush1.bf16.msra.mxu0 0
    %256 = vmatprep.subr.bf16.mxu0 0
    %257 = vmatpush1.bf16.msra.mxu0 0
    %258 = vmatprep.subr.bf16.mxu0 0
    %259 = vmatpush1.bf16.msra.mxu0 0
    %260 = vmatprep.subr.bf16.mxu0 0
    %261 = vmatpush1.bf16.msra.mxu0 0
    %262 = vmatprep.subr.bf16.mxu0 0
    %263 = vmatpush1.bf16.msra.mxu0 %v247
    %264 = vmatprep.subr.bf16.mxu0 0
    %265 = vmatpush1.bf16.msra.mxu0 %v246
    %266 = vmatprep.subr.bf16.mxu0 0
    %267 = vmatpush2.bf16.msra.mxu0 0
    %268 = vmatprep.subr.bf16.mxu0 0
    %269 = vmatpush2.bf16.msra.mxu0 0
    %270 = vmatprep.subr.bf16.mxu0 0
    %271 = vmatpush2.bf16.msra.mxu0 0
    %272 = vmatprep.subr.bf16.mxu0 0
    %273 = vmatpush2.bf16.msra.mxu0 0
    %274 = vmatprep.subr.bf16.mxu0 0
    %275 = vmatpush2.bf16.msra.mxu0 0
    %276 = vmatprep.subr.bf16.mxu0 0
    %277 = vmatpush2.bf16.msra.mxu0 0
    %278 = vmatprep.subr.bf16.mxu0 0
    %279 = vmatpush2.bf16.msra.mxu0 0
    %280 = vmatprep.subr.bf16.mxu0 0
    %281 = vmatpush2.bf16.msra.mxu0 0
    %282 = vmatprep.mubr.bf16.mxu0 0
    %283 = vmatmul.mubr.bf16.gmra.mxu0 %v173
    %v284 = vpop.f32.mrf.mxu0
    %v285 = vadd.f32 %v236, %v284
    %v286 = vpop.f32.mrf.mxu0
    %v287 = vpop.f32.mrf.mxu0
    %v288 = vadd.f32 %v236, %v287
    %v289 = vpop.f32.mrf.mxu0
    %290 = vmatprep.mubr.bf16.mxu0 0
    %291 = vmatmul.mubr.bf16.gmra.mxu0 %v176
    %v292 = vpop.f32.mrf.mxu0
    %v293 = vadd.f32 %v236, %v292
    %v294 = vpop.f32.mrf.mxu0
    %v295 = vpop.f32.mrf.mxu0
    %v296 = vadd.f32 %v236, %v295
    %v297 = vpop.f32.mrf.mxu0
    %298 = vdwg.mxu0
    %v299 = vpack.c.bf16 %v216, %v213
    %v300 = vpack.c.bf16 %v224, %v221
    %v303 = vunpack.c.l.b16 %v299
    %v304 = vunpack.c.h.b16 %v299
    %v305 = vunpack.c.l.b16 %v300
    %v306 = vunpack.c.h.b16 %v300
    %v307 = vpack.c.b16 %v303, %v303
    %v308 = vpack.c.b16 %v304, %v304
    %v309 = vpack.c.b16 %v305, %v305
    %v310 = vpack.c.b16 %v306, %v306
    %vm315 = vcmask 257024
    %316 = vst.msk [vmem:[#allocation5] sm:$0xf] %vm315, %v307
    %317 = vst.msk [vmem:[#allocation5 + $0x4] sm:$0xf] %vm315, %v308
    %318 = vst.msk [vmem:[#allocation5 + $0x8] sm:$0xf] %vm315, %v309
    %319 = vst.msk [vmem:[#allocation5 + $0xc] sm:$0xf] %vm315, %v310
    %v320 = vpack.c.bf16 %v288, %v285
    %v321 = vpack.c.bf16 %v296, %v293
    %v324 = vunpack.c.l.b16 %v320
    %v325 = vunpack.c.h.b16 %v320
    %v326 = vunpack.c.l.b16 %v321
    %v327 = vunpack.c.h.b16 %v321
    %v328 = vpack.c.b16 %v324, %v324
    %v329 = vpack.c.b16 %v325, %v325
    %v330 = vpack.c.b16 %v326, %v326
    %v331 = vpack.c.b16 %v327, %v327
    %336 = vst.msk [vmem:[#allocation6] sm:$0xf] %vm315, %v328
    %337 = vst.msk [vmem:[#allocation6 + $0x4] sm:$0xf] %vm315, %v329
    %338 = vst.msk [vmem:[#allocation6 + $0x8] sm:$0xf] %vm315, %v330
    %339 = vst.msk [vmem:[#allocation6 + $0xc] sm:$0xf] %vm315, %v331
    // Predicated region
    $region38: #{tpu_custom_call.1} parent=1 // pred_check
      _
    $region39: #{tpu_custom_call.1} parent=1 // pred_check_branch
      %341 = sbr.rel (0) target = $region41
    $region40: #{tpu_custom_call.1} parent=1 // pred_region
      %s343 = ssub.s32 256, 256
      %344 = vsyncadd [#allocation4], %s343
      %s345 = sshll.u32 [#allocation5], 4
      %s346 = int_to_ptr.vmem [resolvable:$true] %s345
      %351 = dma.vmem_to_hbm [thread:$0]  %s346, 256, %s8, [#allocation4], 64, 64, 4
    $region41: #{tpu_custom_call.1} parent=1 // pred_fallthru
      _
    // Predicated region
    $region42: #{tpu_custom_call.1} parent=1 // pred_check
      _
    $region43: #{tpu_custom_call.1} parent=1 // pred_check_branch
      %353 = sbr.rel (0) target = $region45
    $region44: #{tpu_custom_call.1} parent=1 // pred_region
      %s355 = ssub.s32 256, 256
      %356 = vsyncadd [#allocation7], %s355
      %s357 = sshll.u32 [#allocation6], 4
      %s358 = int_to_ptr.vmem [resolvable:$true] %s357
      %363 = dma.vmem_to_hbm [thread:$0]  %s358, 256, %s9, [#allocation7], 64, 64, 4
    $region45: #{tpu_custom_call.1} parent=1 // pred_fallthru
      _
    // Predicated region
    $region46: #{tpu_custom_call.1} parent=1 // pred_check
      _
    $region47: #{tpu_custom_call.1} parent=1 // pred_check_branch
      %365 = sbr.rel (0) target = $region49
    $region48: #{tpu_custom_call.1} parent=1 // pred_region
      %366 = dma.done [#allocation4], 256
    $region49: #{tpu_custom_call.1} parent=1 // pred_fallthru
      _
    // Predicated region
    $region50: #{tpu_custom_call.1} parent=1 // pred_check
      _
    $region51: #{tpu_custom_call.1} parent=1 // pred_check_branch
      %368 = sbr.rel (0) target = $region53
    $region52: #{tpu_custom_call.1} parent=1 // pred_region
      %369 = dma.done [#allocation7], 256
    $region53: #{tpu_custom_call.1} parent=1 // pred_fallthru
      _
    %370 = vsyncpa [#allocation3], 1
    %371 = vsyncpa [#allocation4], 1
    %372 = vsyncpa [#allocation7], 1

</llo_original>
